<compile_context>
chip_gen: v7x
topology: tpu7x:2x2x1
jax: 0.10.0
libtpu: 0.0.40
codegen_flags: <defaults>
</compile_context>

<pallas_src>
import functools

import jax
import jax.numpy as jnp
from jax.experimental import pallas as pl
from jax.experimental.pallas import tpu as pltpu


def _round_up(x, m):
    return (x + m - 1) // m * m


def _cdiv(a, b):
    return -(-a // b)


def _default_act_dtype():
    """bf16 activations (tanh path) only on chips with a bf16 VPU/EUP (v6e/v7x)."""
    try:
        kind = jax.devices()[0].device_kind.lower()
    except Exception:
        return jnp.float32
    if "v6" in kind or "v7" in kind:
        return jnp.bfloat16
    return jnp.float32


def _head_kernel(x_ref, w1_ref, b1_ref, w2_ref, b2_ref, o_ref, *, act_dtype):
    # Dropout is identity at inference time.
    # bf16 operands -> native MXU rate; accumulate in f32.
    h = jnp.dot(x_ref[...], w1_ref[...], preferred_element_type=jnp.float32)
    # f32 bias add (h comes out of the MXU in f32), then tanh in act_dtype
    # (bf16 on v6e/v7x: halves VPU/EUP passes and removes the separate
    # downcast before the second matmul; f32 on v5e which has no bf16 EUP).
    h = jnp.tanh((h + b1_ref[...]).astype(act_dtype))
    out = jnp.dot(h.astype(w2_ref.dtype), w2_ref[...],
                  preferred_element_type=jnp.float32)
    o_ref[...] = (out + b2_ref[...]).astype(o_ref.dtype)


def prepare_head_params(w_dense, b_dense, w_out, b_out, *, operand_dtype=jnp.bfloat16):
    """One-time (parameter-load-time) preparation.

    Weight layout convention: weights are [in, out], i.e. the TRANSPOSE of
    PyTorch nn.Linear's `.weight` ([out, in]).  Pass `linear.weight.T`.
    Do NOT call this per forward — it casts/pads the weights once so the
    per-call path touches them only inside the kernel.
    """
    H, H2 = w_dense.shape
    assert H == H2, "dense weight must be square [hidden, hidden]"
    assert w_out.shape[0] == H, "out_proj weight must be [hidden, num_labels]"
    L = w_out.shape[1]
    L_pad = _round_up(L, 128)   # lane-dense output -> unmasked vst

    return {
        "w1": jnp.asarray(w_dense, operand_dtype),                               # [H, H]
        "b1": jnp.asarray(b_dense, jnp.float32).reshape(1, H),                   # [1, H]
        "w2": jnp.pad(jnp.asarray(w_out, operand_dtype), ((0, 0), (0, L_pad - L))),  # [H, L_pad]
        "b2": jnp.pad(jnp.asarray(b_out, jnp.float32), (0, L_pad - L)).reshape(1, L_pad),
        "num_labels": L,
    }


def _vmem_bytes_estimate(TB, H, L_pad, operand_bytes, out_bytes):
    w = H * H * operand_bytes + H * L_pad * operand_bytes   # Buffered(1) resident weights
    b = (H + L_pad) * 4                                     # resident biases (f32)
    x = 2 * TB * H * operand_bytes                          # double-buffered activations
    o = 2 * TB * L_pad * out_bytes                          # double-buffered output tiles
    return w + b + x + o


def hubert_classification_head(features, params, *, block_b=512, act_dtype=None):
    """features: [B, H] (any float dtype); params: output of prepare_head_params."""
    B, H = features.shape
    w1, b1, w2, b2 = params["w1"], params["b1"], params["w2"], params["b2"]
    L = params["num_labels"]
    L_pad = w2.shape[1]
    assert w1.shape == (H, H), "features hidden dim does not match dense weight"

    operand_dtype = w1.dtype
    out_dtype = features.dtype
    if act_dtype is None:
        act_dtype = _default_act_dtype()

    # ---- batch tiling: derive TB from the number of tiles so padding waste
    #      is minimal (e.g. B=200 -> 2 tiles of 104, not pad-to-256). ---------
    sub = 16 if jnp.dtype(operand_dtype).itemsize < 4 else 8
    num_tiles = max(1, _cdiv(B, block_b))
    TB = _round_up(_cdiv(B, num_tiles), sub)
    B_pad = num_tiles * TB

    # Activations: the only per-call cast/pad (B*H elements; cheap vs weights).
    x_p = jnp.pad(features, ((0, B_pad - B), (0, 0))).astype(operand_dtype)

    grid = (num_tiles,)

    # Megacore: only shard batch tiles across TensorCores when each core gets
    # >= 2 full tiles; otherwise a "parallel" grid duplicates the resident
    # weight DMA per TC (a net loss for this weight-bandwidth-bound kernel).
    semantics = ("parallel",) if num_tiles >= 4 else ("arbitrary",)

    # Raise the scoped VMEM limit only if the resident-weight strategy needs it.
    op_bytes = jnp.dtype(operand_dtype).itemsize
    out_bytes = jnp.dtype(out_dtype).itemsize
    est = _vmem_bytes_estimate(TB, H, L_pad, op_bytes, out_bytes)
    vmem_limit = None
    if est > (12 << 20):
        vmem_limit = min(2 * est, 64 << 20)   # cap at v7x physical VMEM per TC

    kernel = functools.partial(_head_kernel, act_dtype=act_dtype)
    resident = dict(pipeline_mode=pl.Buffered(1))   # constant index_map -> 1 buffer

    out_p = pl.pallas_call(
        kernel,
        out_shape=jax.ShapeDtypeStruct((B_pad, L_pad), out_dtype),
        grid_spec=pltpu.PrefetchScalarGridSpec(
            num_scalar_prefetch=0,
            grid=grid,
            in_specs=[
                pl.BlockSpec((TB, H), lambda i: (i, 0)),                 # activations (pipelined)
                pl.BlockSpec((H, H), lambda i: (0, 0), **resident),      # dense weight (resident)
                pl.BlockSpec((1, H), lambda i: (0, 0), **resident),      # dense bias
                pl.BlockSpec((H, L_pad), lambda i: (0, 0), **resident),  # out_proj weight
                pl.BlockSpec((1, L_pad), lambda i: (0, 0), **resident),  # out_proj bias
            ],
            out_specs=pl.BlockSpec((TB, L_pad), lambda i: (i, 0)),
        ),
        compiler_params=pltpu.CompilerParams(
            dimension_semantics=semantics,
            vmem_limit_bytes=vmem_limit,
        ),
    )(x_p, w1, b1, w2, b2)

    return out_p[:B, :L]


if __name__ == "__main__":
    # Synthetic "config": hidden_size=32, num_labels=6, batch=2.
    B, H, L = 2, 32, 6

    key = jax.random.PRNGKey(0)
    k_x, k_w1, k_b1, k_w2, k_b2 = jax.random.split(key, 5)

    features = jax.random.normal(k_x, (B, H), dtype=jnp.float32)
    # Deterministic parameter init (synthetic, not a checkpoint load).
    # NOTE: weights are [in, out] == PyTorch `linear.weight.T`.
    w_dense = jax.random.normal(k_w1, (H, H), dtype=jnp.float32) * 0.05
    b_dense = jax.random.normal(k_b1, (H,), dtype=jnp.float32) * 0.05
    w_out = jax.random.normal(k_w2, (H, L), dtype=jnp.float32) * 0.05
    b_out = jax.random.normal(k_b2, (L,), dtype=jnp.float32) * 0.05

    # One-time parameter prep (load time), NOT per forward.
    params = jax.tree_util.tree_map(
        lambda a: jax.block_until_ready(a) if isinstance(a, jax.Array) else a,
        prepare_head_params(w_dense, b_dense, w_out, b_out),
    )

    out = hubert_classification_head(features, params)
    out = jax.block_until_ready(out)
    assert out.shape == (B, L)

    # Reference with matching precision policy.
    act_dtype = _default_act_dtype()
    xb = features.astype(jnp.bfloat16)
    w1b = w_dense.astype(jnp.bfloat16)
    w2b = w_out.astype(jnp.bfloat16)
    h_ref = jnp.dot(xb, w1b, preferred_element_type=jnp.float32) + b_dense
    h_ref = jnp.tanh(h_ref.astype(act_dtype)).astype(jnp.bfloat16)
    ref = jnp.dot(h_ref, w2b, preferred_element_type=jnp.float32) + b_out
    assert jnp.allclose(out, ref, atol=2e-3, rtol=2e-2)

    # Loose sanity check against full-f32 math (bf16 MXU operands => O(1e-2) rel err).
    ref_f32 = jnp.tanh(features @ w_dense + b_dense) @ w_out + b_out
    assert jnp.allclose(out, ref_f32, atol=5e-2, rtol=5e-2)

    print("KERNEL_OK")
</pallas_src>

<mosaic_0001>
module attributes {stable_mosaic.version = 11 : i64} {
  func.func @_head_kernel(%arg0: i32, %arg1: memref<16x32xbf16, #tpu.memory_space<vmem>>, %arg2: memref<32x32xbf16, #tpu.memory_space<vmem>>, %arg3: memref<1x32xf32, #tpu.memory_space<vmem>>, %arg4: memref<32x128xbf16, #tpu.memory_space<vmem>>, %arg5: memref<1x128xf32, #tpu.memory_space<vmem>>, %arg6: memref<16x128xf32, #tpu.memory_space<vmem>>) attributes {dimension_semantics = [#tpu.dimension_semantics<arbitrary>], iteration_bounds = array<i64: 1>, scalar_prefetch = 0 : i64, scratch_operands = 0 : i64, tpu.core_type = #tpu.core_type<tc>, window_params = [{transform_indices = @transform_0, window_bounds = array<i64: 16, 32>}, {pipeline_mode = #tpu.pipeline_mode<synchronous>, transform_indices = @transform_1, window_bounds = array<i64: 32, 32>}, {pipeline_mode = #tpu.pipeline_mode<synchronous>, transform_indices = @transform_2, window_bounds = array<i64: 1, 32>}, {pipeline_mode = #tpu.pipeline_mode<synchronous>, transform_indices = @transform_3, window_bounds = array<i64: 32, 128>}, {pipeline_mode = #tpu.pipeline_mode<synchronous>, transform_indices = @transform_4, window_bounds = array<i64: 1, 128>}, {transform_indices = @transform_5, window_bounds = array<i64: 16, 128>}]} {
    %c0 = arith.constant 0 : index
    %c0_0 = arith.constant 0 : index
    %0 = vector.load %arg1[%c0, %c0_0] : memref<16x32xbf16, #tpu.memory_space<vmem>>, vector<16x32xbf16>
    %c0_1 = arith.constant 0 : index
    %c0_2 = arith.constant 0 : index
    %1 = vector.load %arg2[%c0_1, %c0_2] : memref<32x32xbf16, #tpu.memory_space<vmem>>, vector<32x32xbf16>
    %cst = arith.constant dense<0.000000e+00> : vector<16x32xf32>
    %2 = tpu.matmul %0, %1, %cst {dimension_numbers = #tpu.dot_dimension_numbers<[1], [0], [0], [1], [0, 0, 1, 1], [], []>} : vector<16x32xbf16>, vector<32x32xbf16>, vector<16x32xf32> -> vector<16x32xf32>
    %c0_3 = arith.constant 0 : index
    %c0_4 = arith.constant 0 : index
    %3 = vector.load %arg3[%c0_3, %c0_4] : memref<1x32xf32, #tpu.memory_space<vmem>>, vector<1x32xf32>
    %4 = vector.broadcast %3 : vector<1x32xf32> to vector<16x32xf32>
    %5 = arith.addf %2, %4 : vector<16x32xf32>
    %6 = math.tanh %5 : vector<16x32xf32>
    %7 = arith.truncf %6 : vector<16x32xf32> to vector<16x32xbf16>
    %c0_5 = arith.constant 0 : index
    %c0_6 = arith.constant 0 : index
    %8 = vector.load %arg4[%c0_5, %c0_6] : memref<32x128xbf16, #tpu.memory_space<vmem>>, vector<32x128xbf16>
    %cst_7 = arith.constant dense<0.000000e+00> : vector<16x128xf32>
    %9 = tpu.matmul %7, %8, %cst_7 {dimension_numbers = #tpu.dot_dimension_numbers<[1], [0], [0], [1], [0, 0, 1, 1], [], []>} : vector<16x32xbf16>, vector<32x128xbf16>, vector<16x128xf32> -> vector<16x128xf32>
    %c0_8 = arith.constant 0 : index
    %c0_9 = arith.constant 0 : index
    %10 = vector.load %arg5[%c0_8, %c0_9] : memref<1x128xf32, #tpu.memory_space<vmem>>, vector<1x128xf32>
    %11 = vector.broadcast %10 : vector<1x128xf32> to vector<16x128xf32>
    %12 = arith.addf %9, %11 : vector<16x128xf32>
    %c0_10 = arith.constant 0 : index
    %c0_11 = arith.constant 0 : index
    %13 = vector.load %arg6[%c0_10, %c0_11] : memref<16x128xf32, #tpu.memory_space<vmem>>, vector<16x128xf32>
    tpu.vector_store %arg6[%c0_10, %c0_11], %12 {strides = array<i32>} : memref<16x128xf32, #tpu.memory_space<vmem>>, vector<16x128xf32>,
    return
  }
  func.func @transform_0(%arg0: i32) -> (i32, i32) {
    %c0_i32 = arith.constant 0 : i32
    %c0_i32_0 = arith.constant 0 : i32
    return %arg0, %c0_i32 : i32, i32
  }
  func.func @transform_1(%arg0: i32) -> (i32, i32) {
    %c0_i32 = arith.constant 0 : i32
    %c0_i32_0 = arith.constant 0 : i32
    %c0_i32_1 = arith.constant 0 : i32
    return %c0_i32, %c0_i32_0 : i32, i32
  }
  func.func @transform_2(%arg0: i32) -> (i32, i32) {
    %c0_i32 = arith.constant 0 : i32
    %c0_i32_0 = arith.constant 0 : i32
    %c0_i32_1 = arith.constant 0 : i32
    return %c0_i32, %c0_i32_0 : i32, i32
  }
  func.func @transform_3(%arg0: i32) -> (i32, i32) {
    %c0_i32 = arith.constant 0 : i32
    %c0_i32_0 = arith.constant 0 : i32
    %c0_i32_1 = arith.constant 0 : i32
    return %c0_i32, %c0_i32_0 : i32, i32
  }
  func.func @transform_4(%arg0: i32) -> (i32, i32) {
    %c0_i32 = arith.constant 0 : i32
    %c0_i32_0 = arith.constant 0 : i32
    %c0_i32_1 = arith.constant 0 : i32
    return %c0_i32, %c0_i32_0 : i32, i32
  }
  func.func @transform_5(%arg0: i32) -> (i32, i32) {
    %c0_i32 = arith.constant 0 : i32
    %c0_i32_0 = arith.constant 0 : i32
    return %arg0, %c0_i32 : i32, i32
  }
}

</mosaic_0001>

<llo_original>
// kernel: tpu_custom_call.1
$region0: #{tpu_custom_call.1}
  #allocation0 [shape = 'u32[]', space=smem, size = 0x4, offset = 0x4, fixed_abs, tag = 'smem constant byte address 0x4 - core index']
  #allocation1 [shape = 'u32[144,128]{1,0:T(1,128)}', space=vmem, size = 0x12000, scoped, tag = 'internal scratch']
  %s0 = inlined_call_operand.hbm [shape: bf16[16,32], index: 0, kind: input, shape index: {}]
  %s1 = inlined_call_operand.hbm [shape: bf16[32,32], index: 1, kind: input, shape index: {}]
  %s2 = inlined_call_operand.vmem [shape: f32[1,32], index: 2, kind: input, shape index: {}]
  %s3 = inlined_call_operand.hbm [shape: bf16[32,128], index: 3, kind: input, shape index: {}]
  %s4 = inlined_call_operand.vmem [shape: f32[1,128], index: 4, kind: input, shape index: {}]
  %s5 = inlined_call_operand.hbm [shape: f32[16,128], index: 5, kind: output, shape index: {}]
  %s6 = sld [smem:[#allocation0]]
  $region42: #{tpu_custom_call.1} parent=0
    _
  %s8 = ssub.s32 1, %s6
  %s9 = scalar_select 0, %s8, %s6
  $region1: #{tpu_custom_call.1} parent=0
    #allocation2 [shape = 'u8[4096]{0}', space=vmem, size = 0x1000, scoped, tag = 'input window, operand 0, single buffered']
    #allocation3 [shape = 's32[1]{0}', space=sflag, size = 0x4, scoped, tag = 'scoped memory for tpu_custom_call.1']
    #allocation4 [shape = 's32[1]{0}', space=sflag, size = 0x4, scoped, tag = 'scoped memory for tpu_custom_call.1']
    #allocation5 [shape = 'u8[8192]{0}', space=vmem, size = 0x2000, scoped, tag = 'input window, operand 1, single buffered']
    #allocation6 [shape = 's32[1]{0}', space=sflag, size = 0x4, scoped, tag = 'scoped memory for tpu_custom_call.1']
    #allocation7 [shape = 'u8[8192]{0}', space=vmem, size = 0x2000, scoped, tag = 'input window, operand 3, single buffered']
    #allocation8 [shape = 'u8[8192]{0}', space=vmem, size = 0x2000, scoped, tag = 'output window, operand 0, single buffered']
    %10 = vsyncpa [#allocation3], 0
    %11 = vsyncpa [#allocation6], 0
    %12 = vsyncpa [#allocation4], 0
    // Predicated region
    $region2: #{tpu_custom_call.1} parent=1 // pred_check
      _
    $region3: #{tpu_custom_call.1} parent=1 // pred_check_branch
      %14 = sbr.rel (0) target = $region5
    $region4: #{tpu_custom_call.1} parent=1 // pred_region
      %s16 = ssub.s32 128, 128
      %17 = vsyncadd [#allocation3], %s16
      %s18 = sshll.u32 [#allocation2], 4
      %s19 = int_to_ptr.vmem [resolvable:$true] %s18
      %24 = dma.hbm_to_vmem [thread:$0]  %s0, 128, %s19, [#allocation3], 64, 64, 4
    $region5: #{tpu_custom_call.1} parent=1 // pred_fallthru
      _
    // Predicated region
    $region6: #{tpu_custom_call.1} parent=1 // pred_check
      _
    $region7: #{tpu_custom_call.1} parent=1 // pred_check_branch
      %26 = sbr.rel (0) target = $region9
    $region8: #{tpu_custom_call.1} parent=1 // pred_region
      %s28 = ssub.s32 256, 256
      %29 = vsyncadd [#allocation6], %s28
      %s30 = sshll.u32 [#allocation5], 4
      %s31 = int_to_ptr.vmem [resolvable:$true] %s30
      %36 = dma.hbm_to_vmem [thread:$0]  %s1, 256, %s31, [#allocation6], 64, 64, 4
    $region9: #{tpu_custom_call.1} parent=1 // pred_fallthru
      _
    // Predicated region
    $region10: #{tpu_custom_call.1} parent=1 // pred_check
      _
    $region11: #{tpu_custom_call.1} parent=1 // pred_check_branch
      %38 = sbr.rel (0) target = $region13
    $region12: #{tpu_custom_call.1} parent=1 // pred_region
      _
    $region13: #{tpu_custom_call.1} parent=1 // pred_fallthru
      _
    // Predicated region
    $region14: #{tpu_custom_call.1} parent=1 // pred_check
      _
    $region15: #{tpu_custom_call.1} parent=1 // pred_check_branch
      %40 = sbr.rel (0) target = $region17
    $region16: #{tpu_custom_call.1} parent=1 // pred_region
      %s42 = ssub.s32 256, 256
      %43 = vsyncadd [#allocation6], %s42
      %s44 = sshll.u32 [#allocation7], 4
      %s45 = int_to_ptr.vmem [resolvable:$true] %s44
      %50 = dma.hbm_to_vmem [thread:$0]  %s3, 256, %s45, [#allocation6], 64, 64, 4
    $region17: #{tpu_custom_call.1} parent=1 // pred_fallthru
      _
    // Predicated region
    $region18: #{tpu_custom_call.1} parent=1 // pred_check
      _
    $region19: #{tpu_custom_call.1} parent=1 // pred_check_branch
      %52 = sbr.rel (0) target = $region21
    $region20: #{tpu_custom_call.1} parent=1 // pred_region
      _
    $region21: #{tpu_custom_call.1} parent=1 // pred_fallthru
      _
    // Predicated region
    $region22: #{tpu_custom_call.1} parent=1 // pred_check
      _
    $region23: #{tpu_custom_call.1} parent=1 // pred_check_branch
      %54 = sbr.rel (0) target = $region25
    $region24: #{tpu_custom_call.1} parent=1 // pred_region
      %55 = dma.done [#allocation3], 128
    $region25: #{tpu_custom_call.1} parent=1 // pred_fallthru
      _
    // Predicated region
    $region26: #{tpu_custom_call.1} parent=1 // pred_check
      _
    $region27: #{tpu_custom_call.1} parent=1 // pred_check_branch
      %57 = sbr.rel (0) target = $region29
    $region28: #{tpu_custom_call.1} parent=1 // pred_region
      %58 = dma.done [#allocation6], 256
    $region29: #{tpu_custom_call.1} parent=1 // pred_fallthru
      _
    // Predicated region
    $region30: #{tpu_custom_call.1} parent=1 // pred_check
      _
    $region31: #{tpu_custom_call.1} parent=1 // pred_check_branch
      %60 = sbr.rel (0) target = $region33
    $region32: #{tpu_custom_call.1} parent=1 // pred_region
      %61 = dma.done [#allocation6], 256
    $region33: #{tpu_custom_call.1} parent=1 // pred_fallthru
      _
    %v63 = vld [vmem:[#allocation2] sm:$0xf]
    %v64 = vld [vmem:[#allocation2 + $0x4] sm:$0xf]
    %v65 = vld [vmem:[#allocation5] sm:$0xf]
    %v66 = vld [vmem:[#allocation5 + $0x4] sm:$0xf]
    %v67 = vld [vmem:[#allocation5 + $0x8] sm:$0xf]
    %v68 = vld [vmem:[#allocation5 + $0xc] sm:$0xf]
    %v69 = vld [vmem:[%s2] sm:$0x1]
    %v71 = vlaneseq
    %v72 = vshrl.u32 %v71, 7
    %v73 = vsub.s32 0, %v72
    %v74 = vrot.slane %v69, %v73
    %v78 = vunpack.c.l.b16 %v63
    %v79 = vunpack.c.l.b16 %v64
    %v80 = vpack.c.b16 %v79, %v78
    %v85 = vunpack.c.l.b16 %v65
    %v86 = vunpack.c.l.b16 %v66
    %v87 = vunpack.c.l.b16 %v67
    %v88 = vunpack.c.l.b16 %v68
    %v89 = vpack.c.b16 %v86, %v85
    %v90 = vpack.c.b16 %v88, %v87
    %vm93 = vcmask 261120
    %v95 = vsel %vm93, %v80, 0
    %97 = vmatprep.subr.bf16.mxu0 0
    %98 = vmatpush1.bf16.msra.mxu0 %v89
    %99 = vmatprep.subr.bf16.mxu0 0
    %100 = vmatpush1.bf16.msra.mxu0 %v90
    %101 = vmatprep.subr.bf16.mxu0 0
    %102 = vmatpush1.bf16.msra.mxu0 0
    %103 = vmatprep.subr.bf16.mxu0 0
    %104 = vmatpush1.bf16.msra.mxu0 0
    %105 = vmatprep.subr.bf16.mxu0 0
    %106 = vmatpush1.bf16.msra.mxu0 0
    %107 = vmatprep.subr.bf16.mxu0 0
    %108 = vmatpush1.bf16.msra.mxu0 0
    %109 = vmatprep.subr.bf16.mxu0 0
    %110 = vmatpush1.bf16.msra.mxu0 0
    %111 = vmatprep.subr.bf16.mxu0 0
    %112 = vmatpush1.bf16.msra.mxu0 0
    %113 = vmatprep.subr.bf16.mxu0 0
    %114 = vmatpush1.bf16.msra.mxu0 0
    %115 = vmatprep.subr.bf16.mxu0 0
    %116 = vmatpush1.bf16.msra.mxu0 0
    %117 = vmatprep.subr.bf16.mxu0 0
    %118 = vmatpush1.bf16.msra.mxu0 0
    %119 = vmatprep.subr.bf16.mxu0 0
    %120 = vmatpush1.bf16.msra.mxu0 0
    %121 = vmatprep.subr.bf16.mxu0 0
    %122 = vmatpush1.bf16.msra.mxu0 0
    %123 = vmatprep.subr.bf16.mxu0 0
    %124 = vmatpush1.bf16.msra.mxu0 0
    %125 = vmatprep.subr.bf16.mxu0 0
    %126 = vmatpush1.bf16.msra.mxu0 0
    %127 = vmatprep.subr.bf16.mxu0 0
    %128 = vmatpush1.bf16.msra.mxu0 0
    %129 = vmatprep.mubr.bf16.mxu0 0
    %130 = vmatmul.mubr.bf16.gmra.mrb[0].mxu0 %v95
    %v131 = vpop.f32.mrb[0].mxu0
    %v132 = vadd.f32 %v74, %v131
    %v133 = vpop.f32.mrb[0].mxu0
    %v134 = vpop.f32.mrb[0].mxu0
    %v135 = vadd.f32 %v74, %v134
    %v136 = vpop.f32.mrb[0].mxu0
    %137 = vdwg.mxu0
    %v138 = vtanh.pop %v132
    %v139 = vtanh.pop %v135
    %v140 = vpack.c.bf16 %v139, %v138
    %v141 = vld [vmem:[#allocation7] sm:$0xf]
    %v142 = vld [vmem:[#allocation7 + $0x4] sm:$0xf]
    %v143 = vld [vmem:[#allocation7 + $0x8] sm:$0xf]
    %v144 = vld [vmem:[#allocation7 + $0xc] sm:$0xf]
    %v145 = vld [vmem:[%s4] sm:$0x1]
    %v147 = vlaneseq
    %v148 = vshrl.u32 %v147, 7
    %v149 = vsub.s32 0, %v148
    %v150 = vrot.slane %v145, %v149
    %v156 = vunpack.c.l.b16 %v141
    %v157 = vunpack.c.l.b16 %v142
    %v158 = vunpack.c.l.b16 %v143
    %v159 = vunpack.c.l.b16 %v144
    %v160 = vpack.c.b16 %v157, %v156
    %v161 = vpack.c.b16 %v159, %v158
    %v165 = vsel %vm93, %v140, 0
    %167 = vmatprep.subr.bf16.mxu0 0
    %168 = vmatpush1.bf16.msra.mxu0 %v160
    %169 = vmatprep.subr.bf16.mxu0 0
    %170 = vmatpush1.bf16.msra.mxu0 %v161
    %171 = vmatprep.subr.bf16.mxu0 0
    %172 = vmatpush1.bf16.msra.mxu0 0
    %173 = vmatprep.subr.bf16.mxu0 0
    %174 = vmatpush1.bf16.msra.mxu0 0
    %175 = vmatprep.subr.bf16.mxu0 0
    %176 = vmatpush1.bf16.msra.mxu0 0
    %177 = vmatprep.subr.bf16.mxu0 0
    %178 = vmatpush1.bf16.msra.mxu0 0
    %179 = vmatprep.subr.bf16.mxu0 0
    %180 = vmatpush1.bf16.msra.mxu0 0
    %181 = vmatprep.subr.bf16.mxu0 0
    %182 = vmatpush1.bf16.msra.mxu0 0
    %183 = vmatprep.subr.bf16.mxu0 0
    %184 = vmatpush1.bf16.msra.mxu0 0
    %185 = vmatprep.subr.bf16.mxu0 0
    %186 = vmatpush1.bf16.msra.mxu0 0
    %187 = vmatprep.subr.bf16.mxu0 0
    %188 = vmatpush1.bf16.msra.mxu0 0
    %189 = vmatprep.subr.bf16.mxu0 0
    %190 = vmatpush1.bf16.msra.mxu0 0
    %191 = vmatprep.subr.bf16.mxu0 0
    %192 = vmatpush1.bf16.msra.mxu0 0
    %193 = vmatprep.subr.bf16.mxu0 0
    %194 = vmatpush1.bf16.msra.mxu0 0
    %195 = vmatprep.subr.bf16.mxu0 0
    %196 = vmatpush1.bf16.msra.mxu0 0
    %197 = vmatprep.subr.bf16.mxu0 0
    %198 = vmatpush1.bf16.msra.mxu0 0
    %199 = vmatprep.mubr.bf16.mxu0 0
    %200 = vmatmul.mubr.bf16.gmra.mrb[0].mxu0 %v165
    %v201 = vpop.f32.mrb[0].mxu0
    %v202 = vadd.f32 %v150, %v201
    %v203 = vpop.f32.mrb[0].mxu0
    %v204 = vpop.f32.mrb[0].mxu0
    %v205 = vadd.f32 %v150, %v204
    %v206 = vpop.f32.mrb[0].mxu0
    %207 = vdwg.mxu0
    %208 = vst [vmem:[#allocation8] sm:$0xff] %v202
    %209 = vst [vmem:[#allocation8 + $0x8] sm:$0xff] %v205
    // Predicated region
    $region34: #{tpu_custom_call.1} parent=1 // pred_check
      _
    $region35: #{tpu_custom_call.1} parent=1 // pred_check_branch
      %211 = sbr.rel (0) target = $region37
    $region36: #{tpu_custom_call.1} parent=1 // pred_region
      %s213 = ssub.s32 256, 256
      %214 = vsyncadd [#allocation4], %s213
      %s215 = sshll.u32 [#allocation8], 4
      %s216 = int_to_ptr.vmem [resolvable:$true] %s215
      %221 = dma.vmem_to_hbm [thread:$0]  %s216, 256, %s5, [#allocation4], 128, 128, 8
    $region37: #{tpu_custom_call.1} parent=1 // pred_fallthru
      _
    // Predicated region
    $region38: #{tpu_custom_call.1} parent=1 // pred_check
      _
    $region39: #{tpu_custom_call.1} parent=1 // pred_check_branch
      %223 = sbr.rel (0) target = $region41
    $region40: #{tpu_custom_call.1} parent=1 // pred_region
      %224 = dma.done [#allocation4], 256
    $region41: #{tpu_custom_call.1} parent=1 // pred_fallthru
      _
    %225 = vsyncpa [#allocation3], 1
    %226 = vsyncpa [#allocation6], 1
    %227 = vsyncpa [#allocation4], 1

</llo_original>
